<compile_context>
chip_gen: v7x
topology: tpu7x:2x2x1
jax: 0.10.0
libtpu: 0.0.40
codegen_flags: <defaults>
</compile_context>

<pallas_src>
import numpy as np
import jax
import jax.numpy as jnp
from jax import lax
from jax.experimental import pallas as pl
from jax.experimental.pallas import tpu as pltpu


# ---------------------------------------------------------------------------
# Static permutation construction (identical math to the torch module, numpy).
# ---------------------------------------------------------------------------
def compute_rc_ut_order(ut_len: int, diagonal_offset: int) -> np.ndarray:
    seq_len = int(np.sqrt(2 * ut_len + 0.25) - 0.5) + diagonal_offset
    iu = np.triu_indices(seq_len, diagonal_offset)  # row-major, same as torch
    if len(iu[0]) != ut_len:
        raise ValueError(
            f"Failed to infer sequence length from upper triangular indices. "
            f"Expected {ut_len} but got {len(iu[0])}."
        )
    mat_ut_indexes = np.zeros((seq_len, seq_len), dtype=np.int64)
    mat_ut_indexes[iu] = np.arange(ut_len, dtype=np.int64)
    mask_ut = np.zeros((seq_len, seq_len), dtype=bool)
    mask_ut[iu] = True
    mask_ld = ~mask_ut
    mat_indexes = mat_ut_indexes + mask_ld * mat_ut_indexes.T
    mat_rc_indexes = np.flip(mat_indexes, axis=(0, 1))
    return np.ascontiguousarray(mat_rc_indexes[iu]).astype(np.int32)


def _round_up(a: int, b: int) -> int:
    return (a + b - 1) // b * b


# ---------------------------------------------------------------------------
# In-kernel helper: apply a (TL, TK) 0/1 selection tile to x (TK, TN) on the
# MXU.  Returns an f32 (TL, TN) tile that is bit-exactly the row gather for
# finite inputs.
# ---------------------------------------------------------------------------
def _gather_tile(sel, x, num_chunks):
    if num_chunks == 1:
        # x is already an MXU-native low-precision float (bf16): one matmul.
        return jnp.dot(sel.astype(x.dtype), x, preferred_element_type=jnp.float32)
    # Exact gather of wider floats on the bf16 MXU: split x into num_chunks
    # non-overlapping bf16 chunks (their sum reconstructs x exactly); each
    # matmul against an exact 0/1 matrix with f32 accumulation is exact, and
    # so is the recombination.
    p = sel.astype(jnp.bfloat16)              # one-hot built directly in bf16
    rem = x.astype(jnp.float32)
    out = None
    for _ in range(num_chunks):
        c = rem.astype(jnp.bfloat16)
        rem = rem - c.astype(jnp.float32)
        d = jnp.dot(p, c, preferred_element_type=jnp.float32)
        out = d if out is None else out + d
    return out


# ---------------------------------------------------------------------------
# Kernels
# ---------------------------------------------------------------------------
def _make_gather_kernel(num_chunks, max_count):
    """General path: grid = (row_tiles, lane_tiles, max_count).  Only the
    source tiles listed in ktiles (length counts[i]) are processed; the output
    block is accumulated in place (no scratch accumulator)."""

    def kernel(ktiles_ref, counts_ref, perm_ref, x_ref, o_ref):
        i = pl.program_id(0)
        k = pl.program_id(2)

        @pl.when(k == 0)
        def _init():
            o_ref[...] = jnp.zeros_like(o_ref)

        @pl.when(k < counts_ref[i])
        def _accumulate():
            tl = o_ref.shape[0]
            tk = x_ref.shape[0]
            src_tile = ktiles_ref[i * max_count + k]
            cols = lax.broadcasted_iota(jnp.int32, (tl, tk), 1) + src_tile * tk
            sel = perm_ref[...] == cols                      # (TL, TK) bool
            contrib = _gather_tile(sel, x_ref[...], num_chunks)
            o_ref[...] += contrib.astype(o_ref.dtype)

    return kernel


def _make_fast_gather_kernel(num_chunks):
    """Fast path (max_count == 1): no reduction axis, no init/accumulate."""

    def kernel(ktiles_ref, perm_ref, x_ref, o_ref):
        i = pl.program_id(0)
        tl = o_ref.shape[0]
        tk = x_ref.shape[0]
        src_tile = ktiles_ref[i]
        cols = lax.broadcasted_iota(jnp.int32, (tl, tk), 1) + src_tile * tk
        sel = perm_ref[...] == cols                          # (TL, TK) bool
        o_ref[...] = _gather_tile(sel, x_ref[...], num_chunks).astype(o_ref.dtype)

    return kernel


# ---------------------------------------------------------------------------
# Wrapper
# ---------------------------------------------------------------------------
def switch_reverse_triu(x: jax.Array, reverse: bool, diagonal_offset: int,
                        *, tile_rows=None) -> jax.Array:
    """x: (batch, ut_len, head_num).  `reverse` is a static Python bool."""
    if not reverse:
        return x

    B, L, H = x.shape
    perm = compute_rc_ut_order(L, diagonal_offset)           # (L,) int32, host

    if not jnp.issubdtype(x.dtype, jnp.floating):
        # TODO(synk): integer dtypes have no exact MXU one-hot path; use a
        # plain-JAX gather fallback instead of rounding through the MXU.
        return x[:, jnp.asarray(perm), :]

    if x.dtype == jnp.bfloat16:
        num_chunks = 1     # native MXU dtype: single matmul, exact
    elif x.dtype == jnp.float16:
        num_chunks = 2     # 2x8 bf16 mantissa bits cover fp16's 11 bits
    else:
        num_chunks = 3     # float32: 3 non-overlapping bf16 chunks, exact

    # Lane-dense layout: gather rows of an (L, B*H) slab.
    # TODO(synk): if the surrounding graph can supply / consume this layout
    # directly, drop these transposes (each is a full HBM read+write).
    n = B * H
    x2 = jnp.transpose(x, (1, 0, 2)).reshape(L, n)

    # Row tiles: multiples of 8 (4-byte dtypes) / 16 (packed 16-bit dtypes).
    row_gran = 8 if x.dtype.itemsize >= 4 else 16
    if tile_rows is not None:
        tl = tk = _round_up(min(tile_rows, L), row_gran)
    elif L <= 1024:
        tl = tk = _round_up(L, row_gran)
    else:
        tl = tk = 1024
    l_pad = _round_up(L, tl)

    # Lane tile: prefer the full padded width (one-hot built once per (i, k));
    # split only when the double-buffered x/out blocks would get large.
    n_pad = _round_up(n, 128)
    tn = n_pad
    budget = 16 * 1024 * 1024
    if 2 * (tl + tk) * tn * x.dtype.itemsize > budget:
        tn = 128
        for cand in (1024, 512, 256):
            if n_pad % cand == 0 and 2 * (tl + tk) * cand * x.dtype.itemsize <= budget:
                tn = cand
                break

    x_pad = jnp.pad(x2, ((0, l_pad - L), (0, n_pad - n)))

    perm_pad = np.empty((l_pad,), dtype=np.int32)
    perm_pad[:L] = perm
    perm_pad[L:] = perm[L - 1]       # padded dest rows reuse the last source row
    perm_col = jnp.asarray(perm_pad.reshape(l_pad, 1))

    # Per destination row-tile: compacted list of source k-tiles it references.
    num_i = l_pad // tl
    num_j = n_pad // tn
    tiles_per_i = [np.unique(perm_pad[it * tl:(it + 1) * tl] // tk)
                   for it in range(num_i)]
    counts_np = np.array([t.size for t in tiles_per_i], dtype=np.int32)
    max_count = int(counts_np.max())
    ktiles_np = np.empty((num_i, max_count), dtype=np.int32)
    for it, t in enumerate(tiles_per_i):
        ktiles_np[it, :t.size] = t
        ktiles_np[it, t.size:] = t[-1]   # repeat last id: unchanged block index
                                         # => Pallas skips the (gated-off) DMA

    vmem_limit = 48 * 1024 * 1024        # leaves headroom under v7x's 64 MiB
    # NOTE: on v7x, if xprof shows one TensorCore idle, switch the leading
    # grid axis to pltpu.CORE_PARALLEL; plain "parallel" is safe on all gens.
    # pipeline_mode=pl.Buffered(3) on the x spec is worth sweeping for the
    # HBM-bound bf16/small-N regime.

    if max_count == 1:
        # Fast path: every destination tile reads exactly one source tile.
        ktiles = jnp.asarray(ktiles_np.reshape(num_i))
        out = pl.pallas_call(
            _make_fast_gather_kernel(num_chunks),
            out_shape=jax.ShapeDtypeStruct((l_pad, n_pad), x.dtype),
            grid_spec=pltpu.PrefetchScalarGridSpec(
                num_scalar_prefetch=1,
                grid=(num_i, num_j),
                in_specs=[
                    pl.BlockSpec((tl, 1), lambda i, j, kt: (i, 0)),
                    # Data-dependent source tile via scalar prefetch.
                    pl.BlockSpec((tk, tn), lambda i, j, kt: (kt[i], j)),
                ],
                out_specs=pl.BlockSpec((tl, tn), lambda i, j, kt: (i, j)),
            ),
            compiler_params=pltpu.CompilerParams(
                dimension_semantics=("parallel", "parallel"),
                vmem_limit_bytes=vmem_limit,
            ),
        )(ktiles, perm_col, x_pad)
    else:
        mc = max_count
        ktiles = jnp.asarray(ktiles_np.reshape(num_i * mc))   # flat: tiny SMEM
        counts = jnp.asarray(counts_np)
        out = pl.pallas_call(
            _make_gather_kernel(num_chunks, mc),
            out_shape=jax.ShapeDtypeStruct((l_pad, n_pad), x.dtype),
            grid_spec=pltpu.PrefetchScalarGridSpec(
                num_scalar_prefetch=2,
                grid=(num_i, num_j, mc),     # k extent = max referenced tiles
                in_specs=[
                    pl.BlockSpec((tl, 1), lambda i, j, k, kt, ct: (i, 0)),
                    pl.BlockSpec((tk, tn),
                                 lambda i, j, k, kt, ct: (kt[i * mc + k], j)),
                ],
                out_specs=pl.BlockSpec((tl, tn), lambda i, j, k, kt, ct: (i, j)),
            ),
            compiler_params=pltpu.CompilerParams(
                dimension_semantics=("parallel", "parallel", "arbitrary"),
                vmem_limit_bytes=vmem_limit,
            ),
        )(ktiles, counts, perm_col, x_pad)

    return out[:L, :n].reshape(L, B, H).transpose(1, 0, 2)


# ---------------------------------------------------------------------------
# Example / self-check
# ---------------------------------------------------------------------------
if __name__ == "__main__":
    diagonal_offset = 2
    seq_len = 16
    batch = 2
    head_num = 8
    ut_len = (seq_len - diagonal_offset) * (seq_len - diagonal_offset + 1) // 2  # 105

    key = jax.random.PRNGKey(0)
    x = jax.random.normal(key, (batch, ut_len, head_num), dtype=jnp.float32)

    perm = compute_rc_ut_order(ut_len, diagonal_offset)
    ref = np.asarray(x)[:, perm, :]

    # 1) f32, single-source-tile fast path (no reduction axis).
    out = jax.block_until_ready(
        switch_reverse_triu(x, reverse=True, diagonal_offset=diagonal_offset))
    np.testing.assert_allclose(np.asarray(out), ref, rtol=1e-6, atol=1e-6)

    # 2) f32, forced small row tiles -> exercises the k-tile-skip reduction path.
    out_k = jax.block_until_ready(
        switch_reverse_triu(x, reverse=True, diagonal_offset=diagonal_offset,
                            tile_rows=32))
    np.testing.assert_allclose(np.asarray(out_k), ref, rtol=1e-6, atol=1e-6)

    # 3) bf16, single-matmul path.
    x_bf = x.astype(jnp.bfloat16)
    out_bf = jax.block_until_ready(
        switch_reverse_triu(x_bf, reverse=True, diagonal_offset=diagonal_offset))
    np.testing.assert_allclose(np.asarray(out_bf, dtype=np.float32),
                               np.asarray(x_bf, dtype=np.float32)[:, perm, :],
                               rtol=1e-6, atol=1e-6)

    # 4) reverse=False path (identity).
    out_id = jax.block_until_ready(
        switch_reverse_triu(x, reverse=False, diagonal_offset=diagonal_offset))
    np.testing.assert_array_equal(np.asarray(out_id), np.asarray(x))

    print("KERNEL_OK")
</pallas_src>

<mosaic_0001>
module attributes {stable_mosaic.version = 11 : i64} {
  func.func @kernel(%arg0: i32, %arg1: i32, %arg2: memref<1xi32, #tpu.memory_space<smem>>, %arg3: memref<112x1xi32, #tpu.memory_space<vmem>>, %arg4: memref<112x128xf32, #tpu.memory_space<vmem>>, %arg5: memref<112x128xf32, #tpu.memory_space<vmem>>) attributes {dimension_semantics = [#tpu.dimension_semantics<parallel>, #tpu.dimension_semantics<parallel>], iteration_bounds = array<i64: 1, 1>, scalar_prefetch = 1 : i64, scratch_operands = 0 : i64, tpu.core_type = #tpu.core_type<tc>, window_params = [{transform_indices = @transform_0, window_bounds = array<i64: 112, 1>}, {transform_indices = @transform_1, window_bounds = array<i64: 112, 128>}, {transform_indices = @transform_2, window_bounds = array<i64: 112, 128>}]} {
    %0 = arith.index_cast %arg0 : i32 to index
    %1 = memref.load %arg2[%0] : memref<1xi32, #tpu.memory_space<smem>>
    %2 = tpu.iota {dimensions = array<i32: 1>} : vector<112x112xi32>
    %c112_i32 = arith.constant 112 : i32
    %3 = arith.muli %1, %c112_i32 : i32
    %4 = vector.broadcast %3 : i32 to vector<112x112xi32>
    %5 = arith.addi %2, %4 : vector<112x112xi32>
    %c0 = arith.constant 0 : index
    %c0_0 = arith.constant 0 : index
    %6 = vector.load %arg3[%c0, %c0_0] : memref<112x1xi32, #tpu.memory_space<vmem>>, vector<112x1xi32>
    %7 = vector.broadcast %6 : vector<112x1xi32> to vector<112x112xi32>
    %8 = arith.cmpi eq, %7, %5 : vector<112x112xi32>
    %c0_1 = arith.constant 0 : index
    %c0_2 = arith.constant 0 : index
    %9 = vector.load %arg4[%c0_1, %c0_2] : memref<112x128xf32, #tpu.memory_space<vmem>>, vector<112x128xf32>
    %10 = arith.extui %8 : vector<112x112xi1> to vector<112x112xi32>
    %11 = arith.sitofp %10 : vector<112x112xi32> to vector<112x112xf32>
    %12 = arith.truncf %11 : vector<112x112xf32> to vector<112x112xbf16>
    %13 = arith.truncf %9 : vector<112x128xf32> to vector<112x128xbf16>
    %14 = arith.extf %13 : vector<112x128xbf16> to vector<112x128xf32>
    %15 = arith.subf %9, %14 : vector<112x128xf32>
    %cst = arith.constant dense<0.000000e+00> : vector<112x128xf32>
    %16 = tpu.matmul %12, %13, %cst {dimension_numbers = #tpu.dot_dimension_numbers<[1], [0], [0], [1], [0, 0, 1, 1], [], []>} : vector<112x112xbf16>, vector<112x128xbf16>, vector<112x128xf32> -> vector<112x128xf32>
    %17 = arith.truncf %15 : vector<112x128xf32> to vector<112x128xbf16>
    %18 = arith.extf %17 : vector<112x128xbf16> to vector<112x128xf32>
    %19 = arith.subf %15, %18 : vector<112x128xf32>
    %cst_3 = arith.constant dense<0.000000e+00> : vector<112x128xf32>
    %20 = tpu.matmul %12, %17, %cst_3 {dimension_numbers = #tpu.dot_dimension_numbers<[1], [0], [0], [1], [0, 0, 1, 1], [], []>} : vector<112x112xbf16>, vector<112x128xbf16>, vector<112x128xf32> -> vector<112x128xf32>
    %21 = arith.addf %16, %20 : vector<112x128xf32>
    %22 = arith.truncf %19 : vector<112x128xf32> to vector<112x128xbf16>
    %cst_4 = arith.constant dense<0.000000e+00> : vector<112x128xf32>
    %23 = tpu.matmul %12, %22, %cst_4 {dimension_numbers = #tpu.dot_dimension_numbers<[1], [0], [0], [1], [0, 0, 1, 1], [], []>} : vector<112x112xbf16>, vector<112x128xbf16>, vector<112x128xf32> -> vector<112x128xf32>
    %24 = arith.addf %21, %23 : vector<112x128xf32>
    %c0_5 = arith.constant 0 : index
    %c0_6 = arith.constant 0 : index
    %25 = vector.load %arg5[%c0_5, %c0_6] : memref<112x128xf32, #tpu.memory_space<vmem>>, vector<112x128xf32>
    tpu.vector_store %arg5[%c0_5, %c0_6], %24 {strides = array<i32>} : memref<112x128xf32, #tpu.memory_space<vmem>>, vector<112x128xf32>,
    return
  }
  func.func @transform_0(%arg0: i32, %arg1: i32, %arg2: memref<1xi32, #tpu.memory_space<smem>>) -> (i32, i32) {
    %c0_i32 = arith.constant 0 : i32
    %c0_i32_0 = arith.constant 0 : i32
    return %arg0, %c0_i32 : i32, i32
  }
  func.func @transform_1(%arg0: i32, %arg1: i32, %arg2: memref<1xi32, #tpu.memory_space<smem>>) -> (i32, i32) {
    %0 = arith.index_cast %arg0 : i32 to index
    %1 = memref.load %arg2[%0] : memref<1xi32, #tpu.memory_space<smem>>
    %c0_i32 = arith.constant 0 : i32
    return %1, %arg1 : i32, i32
  }
  func.func @transform_2(%arg0: i32, %arg1: i32, %arg2: memref<1xi32, #tpu.memory_space<smem>>) -> (i32, i32) {
    %c0_i32 = arith.constant 0 : i32
    return %arg0, %arg1 : i32, i32
  }
}

</mosaic_0001>

<llo_original>
// kernel: tpu_custom_call.1
$region0: #{tpu_custom_call.1}
  #allocation0 [shape = 'u32[]', space=smem, size = 0x4, offset = 0x4, fixed_abs, tag = 'smem constant byte address 0x4 - core index']
  #allocation1 [shape = 'u32[144,128]{1,0:T(1,128)}', space=vmem, size = 0x12000, scoped, tag = 'internal scratch']
  #allocation2 [shape = 's32[1]{0}', space=sflag, size = 0x4, scoped, tag = 'scoped memory for tpu_custom_call.1']
  #allocation3 [shape = 's32[1]{0:T(128)S(6)}', space=smem, size = 0x200, scoped, tag = 'prefetched SMEM operand 0']
  %s0 = inlined_call_operand.<no memory space> [shape: s32[1], index: 0, kind: input, shape index: {}]
  %s1 = inlined_call_operand.vmem [shape: s32[112,1], index: 1, kind: input, shape index: {}]
  %s2 = inlined_call_operand.vmem [shape: f32[112,128], index: 2, kind: input, shape index: {}]
  %s3 = inlined_call_operand.hbm [shape: f32[112,128], index: 3, kind: output, shape index: {}]
  %s4 = sld [smem:[#allocation0]]
  $region18: #{tpu_custom_call.1} parent=0
    _
  %s6 = ssub.s32 1, %s4
  %s7 = scalar_select 0, %s6, %s4
  %8 = sst [smem:[#allocation3]] %s0
  $region1: #{tpu_custom_call.1} parent=0
    #allocation4 [shape = 'u8[57344]{0}', space=vmem, size = 0xe000, scoped, tag = 'output window, operand 0, single buffered']
    #allocation5 [shape = 's32[1]{0}', space=sflag, size = 0x4, scoped, tag = 'scoped memory for tpu_custom_call.1']
    %9 = vsyncpa [#allocation5], 0
    // Predicated region
    $region2: #{tpu_custom_call.1} parent=1 // pred_check
      _
    $region3: #{tpu_custom_call.1} parent=1 // pred_check_branch
      %11 = sbr.rel (0) target = $region5
    $region4: #{tpu_custom_call.1} parent=1 // pred_region
      _
    $region5: #{tpu_custom_call.1} parent=1 // pred_fallthru
      _
    // Predicated region
    $region6: #{tpu_custom_call.1} parent=1 // pred_check
      _
    $region7: #{tpu_custom_call.1} parent=1 // pred_check_branch
      %13 = sbr.rel (0) target = $region9
    $region8: #{tpu_custom_call.1} parent=1 // pred_region
      %s14 = sld [smem:[#allocation3]]
      %s15 = smul.u32 14, %s14
      %p16 = scmp.lt.s32.totalorder %s15, 13
      %s17 = scalar_select %p16, %s15, 13
      %s18 = smul.addr %s17, 8
      %s19 = scalar_lea.vmem %s2, %s18
      %s20 = sld [smem:[#allocation3]]
      %s21 = smul.u32 14, %s20
    $region9: #{tpu_custom_call.1} parent=1 // pred_fallthru
      _
    %s22 = sld [smem:[#allocation3]]
    %s23 = smul.u32 14, %s22
    %p24 = scmp.lt.s32.totalorder %s23, 13
    %s25 = scalar_select %p24, %s23, 13
    %s26 = smul.addr %s25, 8
    %s27 = scalar_lea.vmem %s2, %s26
    %s28 = sld [smem:[#allocation3]]
    %s29 = smul.u32 14, %s28
    %p30 = scmp.lt.s32.totalorder %s29, 13
    %s31 = scalar_select %p30, %s29, 13
    %s32 = smul.addr %s31, 8
    %s33 = scalar_lea.vmem %s2, %s32
    %s34 = sld [smem:[#allocation3]]
    %s35 = smul.u32 14, %s34
    %s37 = sld [smem:[#allocation3]]
    %v38 = vlaneseq
    %v39 = vand.u32 %v38, 127
    %s40 = smul.u32 %s37, 112
    %v41 = vstv %s40
    %v42 = vadd.s32 %v39, %v41
    %v43 = vld [vmem:[%s1] sm:$0xff]
    %v44 = vld [vmem:[%s1 + $0x8] sm:$0xff]
    %v45 = vld [vmem:[%s1 + $0x10] sm:$0xff]
    %v46 = vld [vmem:[%s1 + $0x18] sm:$0xff]
    %v47 = vld [vmem:[%s1 + $0x20] sm:$0xff]
    %v48 = vld [vmem:[%s1 + $0x28] sm:$0xff]
    %v49 = vld [vmem:[%s1 + $0x30] sm:$0xff]
    %v50 = vld [vmem:[%s1 + $0x38] sm:$0xff]
    %v51 = vld [vmem:[%s1 + $0x40] sm:$0xff]
    %v52 = vld [vmem:[%s1 + $0x48] sm:$0xff]
    %v53 = vld [vmem:[%s1 + $0x50] sm:$0xff]
    %v54 = vld [vmem:[%s1 + $0x58] sm:$0xff]
    %v55 = vld [vmem:[%s1 + $0x60] sm:$0xff]
    %v56 = vld [vmem:[%s1 + $0x68] sm:$0xff]
    %57 = vset.pattern.permute.xlu0 0
    %58 = vperm.xlu0 %57, %v43
    %v59 = vpop.permute.xlu0 %58
    %60 = vset.pattern.permute.xlu0 0
    %61 = vperm.xlu0 %60, %v44
    %v62 = vpop.permute.xlu0 %61
    %63 = vset.pattern.permute.xlu0 0
    %64 = vperm.xlu0 %63, %v45
    %v65 = vpop.permute.xlu0 %64
    %66 = vset.pattern.permute.xlu0 0
    %67 = vperm.xlu0 %66, %v46
    %v68 = vpop.permute.xlu0 %67
    %69 = vset.pattern.permute.xlu0 0
    %70 = vperm.xlu0 %69, %v47
    %v71 = vpop.permute.xlu0 %70
    %72 = vset.pattern.permute.xlu0 0
    %73 = vperm.xlu0 %72, %v48
    %v74 = vpop.permute.xlu0 %73
    %75 = vset.pattern.permute.xlu0 0
    %76 = vperm.xlu0 %75, %v49
    %v77 = vpop.permute.xlu0 %76
    %78 = vset.pattern.permute.xlu0 0
    %79 = vperm.xlu0 %78, %v50
    %v80 = vpop.permute.xlu0 %79
    %81 = vset.pattern.permute.xlu0 0
    %82 = vperm.xlu0 %81, %v51
    %v83 = vpop.permute.xlu0 %82
    %84 = vset.pattern.permute.xlu0 0
    %85 = vperm.xlu0 %84, %v52
    %v86 = vpop.permute.xlu0 %85
    %87 = vset.pattern.permute.xlu0 0
    %88 = vperm.xlu0 %87, %v53
    %v89 = vpop.permute.xlu0 %88
    %90 = vset.pattern.permute.xlu0 0
    %91 = vperm.xlu0 %90, %v54
    %v92 = vpop.permute.xlu0 %91
    %93 = vset.pattern.permute.xlu0 0
    %94 = vperm.xlu0 %93, %v55
    %v95 = vpop.permute.xlu0 %94
    %96 = vset.pattern.permute.xlu0 0
    %97 = vperm.xlu0 %96, %v56
    %v98 = vpop.permute.xlu0 %97
    %vm99 = vcmp.eq.s32.totalorder %v59, %v42
    %vm100 = vcmp.eq.s32.totalorder %v62, %v42
    %vm101 = vcmp.eq.s32.totalorder %v65, %v42
    %vm102 = vcmp.eq.s32.totalorder %v68, %v42
    %vm103 = vcmp.eq.s32.totalorder %v71, %v42
    %vm104 = vcmp.eq.s32.totalorder %v74, %v42
    %vm105 = vcmp.eq.s32.totalorder %v77, %v42
    %vm106 = vcmp.eq.s32.totalorder %v80, %v42
    %vm107 = vcmp.eq.s32.totalorder %v83, %v42
    %vm108 = vcmp.eq.s32.totalorder %v86, %v42
    %vm109 = vcmp.eq.s32.totalorder %v89, %v42
    %vm110 = vcmp.eq.s32.totalorder %v92, %v42
    %vm111 = vcmp.eq.s32.totalorder %v95, %v42
    %vm112 = vcmp.eq.s32.totalorder %v98, %v42
    %v113 = vld [vmem:[%s33] sm:$0xff]
    %v114 = vld [vmem:[%s33 + $0x8] sm:$0xff]
    %v115 = vld [vmem:[%s33 + $0x10] sm:$0xff]
    %v116 = vld [vmem:[%s33 + $0x18] sm:$0xff]
    %v117 = vld [vmem:[%s33 + $0x20] sm:$0xff]
    %v118 = vld [vmem:[%s33 + $0x28] sm:$0xff]
    %v119 = vld [vmem:[%s33 + $0x30] sm:$0xff]
    %v120 = vld [vmem:[%s33 + $0x38] sm:$0xff]
    %v121 = vld [vmem:[%s33 + $0x40] sm:$0xff]
    %v122 = vld [vmem:[%s33 + $0x48] sm:$0xff]
    %v123 = vld [vmem:[%s33 + $0x50] sm:$0xff]
    %v124 = vld [vmem:[%s33 + $0x58] sm:$0xff]
    %v125 = vld [vmem:[%s33 + $0x60] sm:$0xff]
    %v126 = vld [vmem:[%s33 + $0x68] sm:$0xff]
    %v127 = vsel %vm99, 1, 0
    %v128 = vsel %vm100, 1, 0
    %v129 = vsel %vm101, 1, 0
    %v130 = vsel %vm102, 1, 0
    %v131 = vsel %vm103, 1, 0
    %v132 = vsel %vm104, 1, 0
    %v133 = vsel %vm105, 1, 0
    %v134 = vsel %vm106, 1, 0
    %v135 = vsel %vm107, 1, 0
    %v136 = vsel %vm108, 1, 0
    %v137 = vsel %vm109, 1, 0
    %v138 = vsel %vm110, 1, 0
    %v139 = vsel %vm111, 1, 0
    %v140 = vsel %vm112, 1, 0
    %v141 = vcvt.s32.f32 %v127
    %v142 = vcvt.s32.f32 %v128
    %v143 = vcvt.s32.f32 %v129
    %v144 = vcvt.s32.f32 %v130
    %v145 = vcvt.s32.f32 %v131
    %v146 = vcvt.s32.f32 %v132
    %v147 = vcvt.s32.f32 %v133
    %v148 = vcvt.s32.f32 %v134
    %v149 = vcvt.s32.f32 %v135
    %v150 = vcvt.s32.f32 %v136
    %v151 = vcvt.s32.f32 %v137
    %v152 = vcvt.s32.f32 %v138
    %v153 = vcvt.s32.f32 %v139
    %v154 = vcvt.s32.f32 %v140
    %v155 = vpack.c.bf16 %v142, %v141
    %v156 = vpack.c.bf16 %v144, %v143
    %v157 = vpack.c.bf16 %v146, %v145
    %v158 = vpack.c.bf16 %v148, %v147
    %v159 = vpack.c.bf16 %v150, %v149
    %v160 = vpack.c.bf16 %v152, %v151
    %v161 = vpack.c.bf16 %v154, %v153
    %v162 = vpack.c.bf16 %v114, %v113
    %v163 = vpack.c.bf16 %v116, %v115
    %v164 = vpack.c.bf16 %v118, %v117
    %v165 = vpack.c.bf16 %v120, %v119
    %v166 = vpack.c.bf16 %v122, %v121
    %v167 = vpack.c.bf16 %v124, %v123
    %v168 = vpack.c.bf16 %v126, %v125
    %v169 = vunpack.c.l.bf16 %v162
    %v170 = vunpack.c.h.bf16 %v162
    %v171 = vunpack.c.l.bf16 %v163
    %v172 = vunpack.c.h.bf16 %v163
    %v173 = vunpack.c.l.bf16 %v164
    %v174 = vunpack.c.h.bf16 %v164
    %v175 = vunpack.c.l.bf16 %v165
    %v176 = vunpack.c.h.bf16 %v165
    %v177 = vunpack.c.l.bf16 %v166
    %v178 = vunpack.c.h.bf16 %v166
    %v179 = vunpack.c.l.bf16 %v167
    %v180 = vunpack.c.h.bf16 %v167
    %v181 = vunpack.c.l.bf16 %v168
    %v182 = vunpack.c.h.bf16 %v168
    %v183 = vsub.f32 %v113, %v169
    %v184 = vsub.f32 %v114, %v170
    %v185 = vsub.f32 %v115, %v171
    %v186 = vsub.f32 %v116, %v172
    %v187 = vsub.f32 %v117, %v173
    %v188 = vsub.f32 %v118, %v174
    %v189 = vsub.f32 %v119, %v175
    %v190 = vsub.f32 %v120, %v176
    %v191 = vsub.f32 %v121, %v177
    %v192 = vsub.f32 %v122, %v178
    %v193 = vsub.f32 %v123, %v179
    %v194 = vsub.f32 %v124, %v180
    %v195 = vsub.f32 %v125, %v181
    %v196 = vsub.f32 %v126, %v182
    %v197 = vpack.c.bf16 %v184, %v183
    %v198 = vpack.c.bf16 %v186, %v185
    %v199 = vpack.c.bf16 %v188, %v187
    %v200 = vpack.c.bf16 %v190, %v189
    %v201 = vpack.c.bf16 %v192, %v191
    %v202 = vpack.c.bf16 %v194, %v193
    %v203 = vpack.c.bf16 %v196, %v195
    %v204 = vunpack.c.l.bf16 %v197
    %v205 = vunpack.c.h.bf16 %v197
    %v206 = vunpack.c.l.bf16 %v198
    %v207 = vunpack.c.h.bf16 %v198
    %v208 = vunpack.c.l.bf16 %v199
    %v209 = vunpack.c.h.bf16 %v199
    %v210 = vunpack.c.l.bf16 %v200
    %v211 = vunpack.c.h.bf16 %v200
    %v212 = vunpack.c.l.bf16 %v201
    %v213 = vunpack.c.h.bf16 %v201
    %v214 = vunpack.c.l.bf16 %v202
    %v215 = vunpack.c.h.bf16 %v202
    %v216 = vunpack.c.l.bf16 %v203
    %v217 = vunpack.c.h.bf16 %v203
    %v218 = vsub.f32 %v183, %v204
    %v219 = vsub.f32 %v184, %v205
    %v220 = vsub.f32 %v185, %v206
    %v221 = vsub.f32 %v186, %v207
    %v222 = vsub.f32 %v187, %v208
    %v223 = vsub.f32 %v188, %v209
    %v224 = vsub.f32 %v189, %v210
    %v225 = vsub.f32 %v190, %v211
    %v226 = vsub.f32 %v191, %v212
    %v227 = vsub.f32 %v192, %v213
    %v228 = vsub.f32 %v193, %v214
    %v229 = vsub.f32 %v194, %v215
    %v230 = vsub.f32 %v195, %v216
    %v231 = vsub.f32 %v196, %v217
    %vm232 = vcmask 916480
    %v234 = vsel %vm232, %v155, 0
    %v237 = vsel %vm232, %v156, 0
    %v240 = vsel %vm232, %v157, 0
    %v243 = vsel %vm232, %v158, 0
    %v246 = vsel %vm232, %v159, 0
    %v249 = vsel %vm232, %v160, 0
    %v252 = vsel %vm232, %v161, 0
    %254 = vmatprep.subr.bf16.mxu0 0
    %255 = vmatpush1.bf16.msra.mxu0 %v197
    %256 = vmatprep.subr.bf16.mxu0 0
    %257 = vmatpush1.bf16.msra.mxu0 %v198
    %258 = vmatprep.subr.bf16.mxu0 0
    %259 = vmatpush1.bf16.msra.mxu0 %v199
    %260 = vmatprep.subr.bf16.mxu0 0
    %261 = vmatpush1.bf16.msra.mxu0 %v200
    %262 = vmatprep.subr.bf16.mxu0 0
    %263 = vmatpush1.bf16.msra.mxu0 %v201
    %264 = vmatprep.subr.bf16.mxu0 0
    %265 = vmatpush1.bf16.msra.mxu0 %v202
    %266 = vmatprep.subr.bf16.mxu0 0
    %267 = vmatpush1.bf16.msra.mxu0 %v203
    %268 = vmatprep.subr.bf16.mxu0 0
    %269 = vmatpush1.bf16.msra.mxu0 0
    %270 = vmatprep.subr.bf16.mxu0 0
    %271 = vmatpush1.bf16.msra.mxu0 0
    %272 = vmatprep.subr.bf16.mxu0 0
    %273 = vmatpush1.bf16.msra.mxu0 0
    %274 = vmatprep.subr.bf16.mxu0 0
    %275 = vmatpush1.bf16.msra.mxu0 0
    %276 = vmatprep.subr.bf16.mxu0 0
    %277 = vmatpush1.bf16.msra.mxu0 0
    %278 = vmatprep.subr.bf16.mxu0 0
    %279 = vmatpush1.bf16.msra.mxu0 0
    %280 = vmatprep.subr.bf16.mxu0 0
    %281 = vmatpush1.bf16.msra.mxu0 0
    %282 = vmatprep.subr.bf16.mxu0 0
    %283 = vmatpush1.bf16.msra.mxu0 0
    %284 = vmatprep.subr.bf16.mxu0 0
    %285 = vmatpush1.bf16.msra.mxu0 0
    %286 = vmatprep.mubr.bf16.mxu0 0
    %287 = vmatmul.mubr.bf16.gmra.mrb[0].mxu0 %v234
    %v288 = vpop.f32.mrb[0].mxu0
    %v289 = vadd.f32 0.0, %v288
    %v290 = vpop.f32.mrb[0].mxu0
    %v291 = vpop.f32.mrb[0].mxu0
    %v292 = vadd.f32 0.0, %v291
    %v293 = vpop.f32.mrb[0].mxu0
    %294 = vmatprep.mubr.bf16.mxu0 0
    %295 = vmatmul.mubr.bf16.gmra.mrb[0].mxu0 %v237
    %v296 = vpop.f32.mrb[0].mxu0
    %v297 = vadd.f32 0.0, %v296
    %v298 = vpop.f32.mrb[0].mxu0
    %v299 = vpop.f32.mrb[0].mxu0
    %v300 = vadd.f32 0.0, %v299
    %v301 = vpop.f32.mrb[0].mxu0
    %302 = vmatprep.mubr.bf16.mxu0 0
    %303 = vmatmul.mubr.bf16.gmra.mrb[0].mxu0 %v240
    %v304 = vpop.f32.mrb[0].mxu0
    %v305 = vadd.f32 0.0, %v304
    %v306 = vpop.f32.mrb[0].mxu0
    %v307 = vpop.f32.mrb[0].mxu0
    %v308 = vadd.f32 0.0, %v307
    %v309 = vpop.f32.mrb[0].mxu0
    %310 = vmatprep.mubr.bf16.mxu0 0
    %311 = vmatmul.mubr.bf16.gmra.mrb[0].mxu0 %v243
    %v312 = vpop.f32.mrb[0].mxu0
    %v313 = vadd.f32 0.0, %v312
    %v314 = vpop.f32.mrb[0].mxu0
    %v315 = vpop.f32.mrb[0].mxu0
    %v316 = vadd.f32 0.0, %v315
    %v317 = vpop.f32.mrb[0].mxu0
    %318 = vmatprep.mubr.bf16.mxu0 0
    %319 = vmatmul.mubr.bf16.gmra.mrb[0].mxu0 %v246
    %v320 = vpop.f32.mrb[0].mxu0
    %v321 = vadd.f32 0.0, %v320
    %v322 = vpop.f32.mrb[0].mxu0
    %v323 = vpop.f32.mrb[0].mxu0
    %v324 = vadd.f32 0.0, %v323
    %v325 = vpop.f32.mrb[0].mxu0
    %326 = vmatprep.mubr.bf16.mxu0 0
    %327 = vmatmul.mubr.bf16.gmra.mrb[0].mxu0 %v249
    %v328 = vpop.f32.mrb[0].mxu0
    %v329 = vadd.f32 0.0, %v328
    %v330 = vpop.f32.mrb[0].mxu0
    %v331 = vpop.f32.mrb[0].mxu0
    %v332 = vadd.f32 0.0, %v331
    %v333 = vpop.f32.mrb[0].mxu0
    %334 = vmatprep.mubr.bf16.mxu0 0
    %335 = vmatmul.mubr.bf16.gmra.mrb[0].mxu0 %v252
    %v336 = vpop.f32.mrb[0].mxu0
    %v337 = vadd.f32 0.0, %v336
    %v338 = vpop.f32.mrb[0].mxu0
    %v339 = vpop.f32.mrb[0].mxu0
    %v340 = vadd.f32 0.0, %v339
    %v341 = vpop.f32.mrb[0].mxu0
    %342 = vdwg.mxu0
    %343 = vmatprep.subr.bf16.mxu0 0
    %344 = vmatpush1.bf16.msra.mxu0 %v162
    %345 = vmatprep.subr.bf16.mxu0 0
    %346 = vmatpush1.bf16.msra.mxu0 %v163
    %347 = vmatprep.subr.bf16.mxu0 0
    %348 = vmatpush1.bf16.msra.mxu0 %v164
    %349 = vmatprep.subr.bf16.mxu0 0
    %350 = vmatpush1.bf16.msra.mxu0 %v165
    %351 = vmatprep.subr.bf16.mxu0 0
    %352 = vmatpush1.bf16.msra.mxu0 %v166
    %353 = vmatprep.subr.bf16.mxu0 0
    %354 = vmatpush1.bf16.msra.mxu0 %v167
    %355 = vmatprep.subr.bf16.mxu0 0
    %356 = vmatpush1.bf16.msra.mxu0 %v168
    %357 = vmatprep.subr.bf16.mxu0 0
    %358 = vmatpush1.bf16.msra.mxu0 0
    %359 = vmatprep.subr.bf16.mxu0 0
    %360 = vmatpush1.bf16.msra.mxu0 0
    %361 = vmatprep.subr.bf16.mxu0 0
    %362 = vmatpush1.bf16.msra.mxu0 0
    %363 = vmatprep.subr.bf16.mxu0 0
    %364 = vmatpush1.bf16.msra.mxu0 0
    %365 = vmatprep.subr.bf16.mxu0 0
    %366 = vmatpush1.bf16.msra.mxu0 0
    %367 = vmatprep.subr.bf16.mxu0 0
    %368 = vmatpush1.bf16.msra.mxu0 0
    %369 = vmatprep.subr.bf16.mxu0 0
    %370 = vmatpush1.bf16.msra.mxu0 0
    %371 = vmatprep.subr.bf16.mxu0 0
    %372 = vmatpush1.bf16.msra.mxu0 0
    %373 = vmatprep.subr.bf16.mxu0 0
    %374 = vmatpush1.bf16.msra.mxu0 0
    %375 = vmatprep.mubr.bf16.mxu0 0
    %376 = vmatmul.mubr.bf16.gmra.mrb[0].mxu0 %v234
    %v377 = vpop.f32.mrb[0].mxu0
    %v378 = vadd.f32 %v289, %v377
    %v379 = vpop.f32.mrb[0].mxu0
    %v380 = vpop.f32.mrb[0].mxu0
    %v381 = vadd.f32 %v292, %v380
    %v382 = vpop.f32.mrb[0].mxu0
    %383 = vmatprep.mubr.bf16.mxu0 0
    %384 = vmatmul.mubr.bf16.gmra.mrb[0].mxu0 %v237
    %v385 = vpop.f32.mrb[0].mxu0
    %v386 = vadd.f32 %v297, %v385
    %v387 = vpop.f32.mrb[0].mxu0
    %v388 = vpop.f32.mrb[0].mxu0
    %v389 = vadd.f32 %v300, %v388
    %v390 = vpop.f32.mrb[0].mxu0
    %391 = vmatprep.mubr.bf16.mxu0 0
    %392 = vmatmul.mubr.bf16.gmra.mrb[0].mxu0 %v240
    %v393 = vpop.f32.mrb[0].mxu0
    %v394 = vadd.f32 %v305, %v393
    %v395 = vpop.f32.mrb[0].mxu0
    %v396 = vpop.f32.mrb[0].mxu0
    %v397 = vadd.f32 %v308, %v396
    %v398 = vpop.f32.mrb[0].mxu0
    %399 = vmatprep.mubr.bf16.mxu0 0
    %400 = vmatmul.mubr.bf16.gmra.mrb[0].mxu0 %v243
    %v401 = vpop.f32.mrb[0].mxu0
    %v402 = vadd.f32 %v313, %v401
    %v403 = vpop.f32.mrb[0].mxu0
    %v404 = vpop.f32.mrb[0].mxu0
    %v405 = vadd.f32 %v316, %v404
    %v406 = vpop.f32.mrb[0].mxu0
    %407 = vmatprep.mubr.bf16.mxu0 0
    %408 = vmatmul.mubr.bf16.gmra.mrb[0].mxu0 %v246
    %v409 = vpop.f32.mrb[0].mxu0
    %v410 = vadd.f32 %v321, %v409
    %v411 = vpop.f32.mrb[0].mxu0
    %v412 = vpop.f32.mrb[0].mxu0
    %v413 = vadd.f32 %v324, %v412
    %v414 = vpop.f32.mrb[0].mxu0
    %415 = vmatprep.mubr.bf16.mxu0 0
    %416 = vmatmul.mubr.bf16.gmra.mrb[0].mxu0 %v249
    %v417 = vpop.f32.mrb[0].mxu0
    %v418 = vadd.f32 %v329, %v417
    %v419 = vpop.f32.mrb[0].mxu0
    %v420 = vpop.f32.mrb[0].mxu0
    %v421 = vadd.f32 %v332, %v420
    %v422 = vpop.f32.mrb[0].mxu0
    %423 = vmatprep.mubr.bf16.mxu0 0
    %424 = vmatmul.mubr.bf16.gmra.mrb[0].mxu0 %v252
    %v425 = vpop.f32.mrb[0].mxu0
    %v426 = vadd.f32 %v337, %v425
    %v427 = vpop.f32.mrb[0].mxu0
    %v428 = vpop.f32.mrb[0].mxu0
    %v429 = vadd.f32 %v340, %v428
    %v430 = vpop.f32.mrb[0].mxu0
    %431 = vdwg.mxu0
    %v432 = vpack.c.bf16 %v219, %v218
    %v433 = vpack.c.bf16 %v221, %v220
    %v434 = vpack.c.bf16 %v223, %v222
    %v435 = vpack.c.bf16 %v225, %v224
    %v436 = vpack.c.bf16 %v227, %v226
    %v437 = vpack.c.bf16 %v229, %v228
    %v438 = vpack.c.bf16 %v231, %v230
    %439 = vmatprep.subr.bf16.mxu0 0
    %440 = vmatpush1.bf16.msra.mxu0 %v432
    %441 = vmatprep.subr.bf16.mxu0 0
    %442 = vmatpush1.bf16.msra.mxu0 %v433
    %443 = vmatprep.subr.bf16.mxu0 0
    %444 = vmatpush1.bf16.msra.mxu0 %v434
    %445 = vmatprep.subr.bf16.mxu0 0
    %446 = vmatpush1.bf16.msra.mxu0 %v435
    %447 = vmatprep.subr.bf16.mxu0 0
    %448 = vmatpush1.bf16.msra.mxu0 %v436
    %449 = vmatprep.subr.bf16.mxu0 0
    %450 = vmatpush1.bf16.msra.mxu0 %v437
    %451 = vmatprep.subr.bf16.mxu0 0
    %452 = vmatpush1.bf16.msra.mxu0 %v438
    %453 = vmatprep.subr.bf16.mxu0 0
    %454 = vmatpush1.bf16.msra.mxu0 0
    %455 = vmatprep.subr.bf16.mxu0 0
    %456 = vmatpush1.bf16.msra.mxu0 0
    %457 = vmatprep.subr.bf16.mxu0 0
    %458 = vmatpush1.bf16.msra.mxu0 0
    %459 = vmatprep.subr.bf16.mxu0 0
    %460 = vmatpush1.bf16.msra.mxu0 0
    %461 = vmatprep.subr.bf16.mxu0 0
    %462 = vmatpush1.bf16.msra.mxu0 0
    %463 = vmatprep.subr.bf16.mxu0 0
    %464 = vmatpush1.bf16.msra.mxu0 0
    %465 = vmatprep.subr.bf16.mxu0 0
    %466 = vmatpush1.bf16.msra.mxu0 0
    %467 = vmatprep.subr.bf16.mxu0 0
    %468 = vmatpush1.bf16.msra.mxu0 0
    %469 = vmatprep.subr.bf16.mxu0 0
    %470 = vmatpush1.bf16.msra.mxu0 0
    %471 = vmatprep.mubr.bf16.mxu0 0
    %472 = vmatmul.mubr.bf16.gmra.mrb[0].mxu0 %v234
    %v473 = vpop.f32.mrb[0].mxu0
    %v474 = vadd.f32 0.0, %v473
    %v475 = vpop.f32.mrb[0].mxu0
    %v476 = vpop.f32.mrb[0].mxu0
    %v477 = vadd.f32 0.0, %v476
    %v478 = vpop.f32.mrb[0].mxu0
    %479 = vmatprep.mubr.bf16.mxu0 0
    %480 = vmatmul.mubr.bf16.gmra.mrb[0].mxu0 %v237
    %v481 = vpop.f32.mrb[0].mxu0
    %v482 = vadd.f32 0.0, %v481
    %v483 = vpop.f32.mrb[0].mxu0
    %v484 = vpop.f32.mrb[0].mxu0
    %v485 = vadd.f32 0.0, %v484
    %v486 = vpop.f32.mrb[0].mxu0
    %487 = vmatprep.mubr.bf16.mxu0 0
    %488 = vmatmul.mubr.bf16.gmra.mrb[0].mxu0 %v240
    %v489 = vpop.f32.mrb[0].mxu0
    %v490 = vadd.f32 0.0, %v489
    %v491 = vpop.f32.mrb[0].mxu0
    %v492 = vpop.f32.mrb[0].mxu0
    %v493 = vadd.f32 0.0, %v492
    %v494 = vpop.f32.mrb[0].mxu0
    %495 = vmatprep.mubr.bf16.mxu0 0
    %496 = vmatmul.mubr.bf16.gmra.mrb[0].mxu0 %v243
    %v497 = vpop.f32.mrb[0].mxu0
    %v498 = vadd.f32 0.0, %v497
    %v499 = vpop.f32.mrb[0].mxu0
    %v500 = vpop.f32.mrb[0].mxu0
    %v501 = vadd.f32 0.0, %v500
    %v502 = vpop.f32.mrb[0].mxu0
    %503 = vmatprep.mubr.bf16.mxu0 0
    %504 = vmatmul.mubr.bf16.gmra.mrb[0].mxu0 %v246
    %v505 = vpop.f32.mrb[0].mxu0
    %v506 = vadd.f32 0.0, %v505
    %v507 = vpop.f32.mrb[0].mxu0
    %v508 = vpop.f32.mrb[0].mxu0
    %v509 = vadd.f32 0.0, %v508
    %v510 = vpop.f32.mrb[0].mxu0
    %511 = vmatprep.mubr.bf16.mxu0 0
    %512 = vmatmul.mubr.bf16.gmra.mrb[0].mxu0 %v249
    %v513 = vpop.f32.mrb[0].mxu0
    %v514 = vadd.f32 0.0, %v513
    %v515 = vpop.f32.mrb[0].mxu0
    %v516 = vpop.f32.mrb[0].mxu0
    %v517 = vadd.f32 0.0, %v516
    %v518 = vpop.f32.mrb[0].mxu0
    %519 = vmatprep.mubr.bf16.mxu0 0
    %520 = vmatmul.mubr.bf16.gmra.mrb[0].mxu0 %v252
    %v521 = vpop.f32.mrb[0].mxu0
    %v522 = vadd.f32 0.0, %v521
    %v523 = vpop.f32.mrb[0].mxu0
    %v524 = vpop.f32.mrb[0].mxu0
    %v525 = vadd.f32 0.0, %v524
    %v526 = vpop.f32.mrb[0].mxu0
    %527 = vdwg.mxu0
    %v528 = vadd.f32 %v378, %v474
    %v529 = vadd.f32 %v381, %v477
    %v530 = vadd.f32 %v386, %v482
    %v531 = vadd.f32 %v389, %v485
    %v532 = vadd.f32 %v394, %v490
    %v533 = vadd.f32 %v397, %v493
    %v534 = vadd.f32 %v402, %v498
    %v535 = vadd.f32 %v405, %v501
    %v536 = vadd.f32 %v410, %v506
    %v537 = vadd.f32 %v413, %v509
    %v538 = vadd.f32 %v418, %v514
    %v539 = vadd.f32 %v421, %v517
    %v540 = vadd.f32 %v426, %v522
    %v541 = vadd.f32 %v429, %v525
    %542 = vst [vmem:[#allocation4] sm:$0xff] %v528
    %543 = vst [vmem:[#allocation4 + $0x8] sm:$0xff] %v529
    %544 = vst [vmem:[#allocation4 + $0x10] sm:$0xff] %v530
    %545 = vst [vmem:[#allocation4 + $0x18] sm:$0xff] %v531
    %546 = vst [vmem:[#allocation4 + $0x20] sm:$0xff] %v532
    %547 = vst [vmem:[#allocation4 + $0x28] sm:$0xff] %v533
    %548 = vst [vmem:[#allocation4 + $0x30] sm:$0xff] %v534
    %549 = vst [vmem:[#allocation4 + $0x38] sm:$0xff] %v535
    %550 = vst [vmem:[#allocation4 + $0x40] sm:$0xff] %v536
    %551 = vst [vmem:[#allocation4 + $0x48] sm:$0xff] %v537
    %552 = vst [vmem:[#allocation4 + $0x50] sm:$0xff] %v538
    %553 = vst [vmem:[#allocation4 + $0x58] sm:$0xff] %v539
    %554 = vst [vmem:[#allocation4 + $0x60] sm:$0xff] %v540
    %555 = vst [vmem:[#allocation4 + $0x68] sm:$0xff] %v541
    // Predicated region
    $region10: #{tpu_custom_call.1} parent=1 // pred_check
      _
    $region11: #{tpu_custom_call.1} parent=1 // pred_check_branch
      %557 = sbr.rel (0) target = $region13
    $region12: #{tpu_custom_call.1} parent=1 // pred_region
      %s559 = ssub.s32 1792, 1792
      %560 = vsyncadd [#allocation5], %s559
      %s561 = sshll.u32 [#allocation4], 4
      %s562 = int_to_ptr.vmem [resolvable:$true] %s561
      %567 = dma.vmem_to_hbm [thread:$0]  %s562, 1792, %s3, [#allocation5], 128, 128, 8
    $region13: #{tpu_custom_call.1} parent=1 // pred_fallthru
      _
    // Predicated region
    $region14: #{tpu_custom_call.1} parent=1 // pred_check
      _
    $region15: #{tpu_custom_call.1} parent=1 // pred_check_branch
      %569 = sbr.rel (0) target = $region17
    $region16: #{tpu_custom_call.1} parent=1 // pred_region
      %570 = dma.done [#allocation5], 1792
    $region17: #{tpu_custom_call.1} parent=1 // pred_fallthru
      _
    %571 = vsyncpa [#allocation5], 1

</llo_original>
